<compile_context>
chip_gen: v6e
topology: v6e:2x2x1
jax: 0.10.0
libtpu: 0.0.40
codegen_flags: <defaults>
</compile_context>

<pallas_src>
import jax
import jax.numpy as jnp
from jax.experimental import pallas as pl
from jax.experimental.pallas import tpu as pltpu


_SUB_ROWS = 256  # rows processed per in-kernel chunk (keeps activations in vregs)


def _round_up(x, m):
    return ((x + m - 1) // m) * m


def _make_att_rotation_kernel(n_hidden, block_rows, chunk_rows):
    """Kernel refs: (x_ref, [w_ref, b_ref] * (n_hidden+1), o_ref)."""
    n_chunks = block_rows // chunk_rows

    def kernel(*refs):
        x_ref = refs[0]
        o_ref = refs[-1]
        p = refs[1:-1]

        # Hoist the (tiny) weight / bias loads out of the row-chunk loop; they
        # occupy only a handful of vregs for the whole grid step.
        ws = [p[2 * l][...] for l in range(n_hidden + 1)]
        bs = [p[2 * l + 1][...] for l in range(n_hidden + 1)]

        def compute_rows(r0):
            # f32 rows -> bf16 MXU operand (cast is free; VPU has slack).
            h = x_ref[pl.ds(r0, chunk_rows), :].astype(jnp.bfloat16)
            for l in range(n_hidden):
                a = jnp.dot(h, ws[l], preferred_element_type=jnp.float32) + bs[l]
                a = jnp.maximum(a, 0.0)            # ReLU, f32 (v5e: no bf16 VALU)
                h = a.astype(jnp.bfloat16)         # bf16 only as next MXU operand
            q = (jnp.dot(h, ws[n_hidden], preferred_element_type=jnp.float32)
                 + bs[n_hidden])
            # Per-row L2 normalization, no eps (matches torch.norm division).
            norm_sq = jnp.sum(q * q, axis=-1, keepdims=True)
            o_ref[pl.ds(r0, chunk_rows), :] = (
                q * jax.lax.rsqrt(norm_sq)).astype(o_ref.dtype)

        if n_chunks == 1:
            compute_rows(0)
        else:
            def body(c, carry):
                compute_rows(pl.multiple_of(c * chunk_rows, chunk_rows))
                return carry
            jax.lax.fori_loop(0, n_chunks, body, 0, unroll=True)

    return kernel


def att_rotation(x, weights, biases, *, block_rows=2048, min_pallas_rows=512,
                 use_pallas=None):
    """AttRotation forward.

    x:       (B, M, D) or (B, D) float32 features.
    weights: list of [in_features, out_features] matrices (pre-transposed vs
             torch Linear); the last one must have out_features == 4.
    biases:  list of (out_features,) vectors.
    Returns rotations of shape (B, M*4) (or (B, 4) for 2-D input), matching
    `rotations.view(X.shape[0], -1)`.
    """
    assert len(weights) == len(biases) and weights[-1].shape[-1] == 4
    n_hidden = len(weights) - 1

    D = x.shape[-1]
    x2d = x.reshape(-1, D).astype(jnp.float32)   # reshape is free; no extra pass
    N = x2d.shape[0]

    if use_pallas is None:
        use_pallas = N >= min_pallas_rows
    if not use_pallas:
        # Tiny-N fast path: kernel launch + pipeline prologue would dominate;
        # a fused XLA matmul chain is faster and fully f32-accurate.
        h = x2d
        for w, b in zip(weights[:-1], biases[:-1]):
            h = jnp.maximum(h @ w + b, 0.0)
        q = h @ weights[-1] + biases[-1]
        q = q * jax.lax.rsqrt(jnp.sum(q * q, axis=-1, keepdims=True))
        return q.reshape(x.shape[0], -1)

    # ---- row-block (grid) sizing -------------------------------------------
    if N <= _SUB_ROWS:
        TN = max(8, _round_up(N, 8))             # single small block
    else:
        # Multiple of the in-kernel chunk, and >= 2 grid steps whenever N
        # allows it so the "parallel" axis shards across v7x's two TensorCores.
        tn_cap = _round_up(pl.cdiv(N, 2), _SUB_ROWS)
        TN = max(_SUB_ROWS, min(_round_up(block_rows, _SUB_ROWS), tn_cap))
    chunk = min(_SUB_ROWS, TN)
    num_blocks = pl.cdiv(N, TN)                  # ragged tail via edge-block masking

    # ---- operands ------------------------------------------------------------
    # X stays f32 into the kernel (no wrapper cast/pad passes over X).
    params = []
    in_specs = [pl.BlockSpec((TN, D), lambda i: (i, 0))]
    weight_bytes = 0
    for w, b in zip(weights, biases):
        w_bf16 = jnp.asarray(w, jnp.bfloat16)          # tiny host cast (KiB)
        b_f32 = jnp.asarray(b, jnp.float32).reshape(1, -1)
        # Full-array blocks with constant index_map -> DMA'd once, VMEM-resident.
        in_specs.append(pl.BlockSpec(w_bf16.shape, lambda i: (0, 0)))
        in_specs.append(pl.BlockSpec(b_f32.shape, lambda i: (0, 0)))
        params.extend([w_bf16, b_f32])
        weight_bytes += w_bf16.size * 2 + b_f32.size * 4

    # Scoped-VMEM guard (v5e default is only 16 MiB): double-buffered X / out
    # blocks + resident weights + per-chunk temporaries + margin.
    max_f = max([w.shape[-1] for w in weights] + [D])
    vmem_est = (2 * TN * D * 4          # X block, double-buffered
                + 2 * TN * 4 * 4        # out block, double-buffered
                + 2 * weight_bytes
                + 6 * chunk * max_f * 4  # per-chunk activations / temporaries
                + (2 << 20))
    vmem_limit = int(min(max(vmem_est, 32 << 20), 56 << 20))

    out = pl.pallas_call(
        _make_att_rotation_kernel(n_hidden, TN, chunk),
        out_shape=jax.ShapeDtypeStruct((N, 4), jnp.float32),
        grid=(num_blocks,),
        in_specs=in_specs,
        out_specs=pl.BlockSpec((TN, 4), lambda i: (i, 0)),
        compiler_params=pltpu.CompilerParams(
            dimension_semantics=("parallel",),
            vmem_limit_bytes=vmem_limit),
    )(x2d, *params)

    return out.reshape(x.shape[0], -1)


def att_rotation_ref_f32(x, weights, biases):
    """Pure-JAX f32 reference mirroring the PyTorch forward."""
    h = x.reshape(-1, x.shape[-1]).astype(jnp.float32)
    for w, b in zip(weights[:-1], biases[:-1]):
        h = jnp.maximum(h @ w + b, 0.0)
    q = h @ weights[-1] + biases[-1]
    q = q / jnp.linalg.norm(q, axis=-1, keepdims=True)
    return q.reshape(x.shape[0], -1)


def att_rotation_ref_bf16(x, weights, biases):
    """Reference mirroring the kernel's bf16-operand / f32-accumulate math."""
    h = x.reshape(-1, x.shape[-1]).astype(jnp.bfloat16).astype(jnp.float32)
    for w, b in zip(weights[:-1], biases[:-1]):
        h = jnp.dot(h.astype(jnp.bfloat16), w.astype(jnp.bfloat16),
                    preferred_element_type=jnp.float32) + b
        h = jnp.maximum(h, 0.0)
    q = jnp.dot(h.astype(jnp.bfloat16), weights[-1].astype(jnp.bfloat16),
                preferred_element_type=jnp.float32) + biases[-1]
    q = q * jax.lax.rsqrt(jnp.sum(q * q, axis=-1, keepdims=True))
    return q.reshape(x.shape[0], -1)


if __name__ == "__main__":
    # Shapes consistent with the module:
    #   X: (B, n_primitives, input_dims) attention features
    #   fc: Linear(D, hidden) + ReLU (n_layers-1 times), then Linear(*, 4)
    input_dims = 32          # fe.feature_shape
    n_layers = 2             # config['data']['n_layers']
    hidden_units = 128       # config['data']['hidden_units'] (default)

    key = jax.random.PRNGKey(0)
    keys = jax.random.split(key, 2 + 2 * n_layers)

    weights, biases = [], []
    in_f = input_dims
    kidx = 2
    for _ in range(n_layers - 1):
        weights.append(jax.random.normal(keys[kidx], (in_f, hidden_units),
                                         jnp.float32) * 0.1)
        biases.append(jax.random.normal(keys[kidx + 1], (hidden_units,),
                                        jnp.float32) * 0.1)
        in_f = hidden_units
        kidx += 2
    weights.append(jax.random.normal(keys[kidx], (in_f, 4), jnp.float32) * 0.1)
    biases.append(jax.random.normal(keys[kidx + 1], (4,), jnp.float32) * 0.1)

    # ---- Case 1: demo-scale input, forced through the Pallas kernel ----------
    B1, M1 = 2, 8
    x1 = jax.random.normal(keys[0], (B1, M1, input_dims), jnp.float32)
    out1 = att_rotation(x1, weights, biases, use_pallas=True)
    out1 = jax.block_until_ready(out1)
    assert out1.shape == (B1, M1 * 4)
    assert jnp.allclose(out1, att_rotation_ref_bf16(x1, weights, biases),
                        atol=2e-3, rtol=2e-3), "case1: mismatch vs bf16-mirrored ref"
    assert jnp.allclose(out1, att_rotation_ref_f32(x1, weights, biases),
                        atol=3e-2, rtol=3e-2), "case1: mismatch vs f32 ref"

    # ---- Case 2: larger ragged N (edge-block masking, >=2 parallel steps) ----
    B2, M2 = 4, 1021                       # N = 4084 (not a multiple of TN/chunk)
    x2 = jax.random.normal(keys[1], (B2, M2, input_dims), jnp.float32)
    out2 = att_rotation(x2, weights, biases)         # default Pallas path
    out2 = jax.block_until_ready(out2)
    assert out2.shape == (B2, M2 * 4)
    assert jnp.allclose(out2, att_rotation_ref_bf16(x2, weights, biases),
                        atol=2e-3, rtol=2e-3), "case2: mismatch vs bf16-mirrored ref"

    # ---- Case 3: tiny N on the default dispatch -> pure-JAX fast path --------
    out3 = att_rotation(x1, weights, biases)
    out3 = jax.block_until_ready(out3)
    assert jnp.allclose(out3, att_rotation_ref_f32(x1, weights, biases),
                        atol=1e-5, rtol=1e-5), "case3: fast path mismatch vs f32 ref"

    print("KERNEL_OK")
</pallas_src>

<mosaic_0001>
module attributes {stable_mosaic.version = 11 : i64} {
  func.func @kernel(%arg0: i32, %arg1: memref<16x32xf32, #tpu.memory_space<vmem>>, %arg2: memref<32x128xbf16, #tpu.memory_space<vmem>>, %arg3: memref<1x128xf32, #tpu.memory_space<vmem>>, %arg4: memref<128x4xbf16, #tpu.memory_space<vmem>>, %arg5: memref<1x4xf32, #tpu.memory_space<vmem>>, %arg6: memref<16x4xf32, #tpu.memory_space<vmem>>) attributes {dimension_semantics = [#tpu.dimension_semantics<parallel>], iteration_bounds = array<i64: 1>, scalar_prefetch = 0 : i64, scratch_operands = 0 : i64, tpu.core_type = #tpu.core_type<tc>, window_params = [{transform_indices = @transform_0, window_bounds = array<i64: 16, 32>}, {pipeline_mode = #tpu.pipeline_mode<synchronous>, transform_indices = @transform_1, window_bounds = array<i64: 32, 128>}, {pipeline_mode = #tpu.pipeline_mode<synchronous>, transform_indices = @transform_2, window_bounds = array<i64: 1, 128>}, {pipeline_mode = #tpu.pipeline_mode<synchronous>, transform_indices = @transform_3, window_bounds = array<i64: 128, 4>}, {pipeline_mode = #tpu.pipeline_mode<synchronous>, transform_indices = @transform_4, window_bounds = array<i64: 1, 4>}, {transform_indices = @transform_5, window_bounds = array<i64: 16, 4>}]} {
    %c0 = arith.constant 0 : index
    %c0_0 = arith.constant 0 : index
    %0 = vector.load %arg2[%c0, %c0_0] : memref<32x128xbf16, #tpu.memory_space<vmem>>, vector<32x128xbf16>
    %c0_1 = arith.constant 0 : index
    %c0_2 = arith.constant 0 : index
    %1 = vector.load %arg4[%c0_1, %c0_2] : memref<128x4xbf16, #tpu.memory_space<vmem>>, vector<128x4xbf16>
    %c0_3 = arith.constant 0 : index
    %c0_4 = arith.constant 0 : index
    %2 = vector.load %arg3[%c0_3, %c0_4] : memref<1x128xf32, #tpu.memory_space<vmem>>, vector<1x128xf32>
    %c0_5 = arith.constant 0 : index
    %c0_6 = arith.constant 0 : index
    %3 = vector.load %arg5[%c0_5, %c0_6] : memref<1x4xf32, #tpu.memory_space<vmem>>, vector<1x4xf32>
    %c0_7 = arith.constant 0 : index
    %c0_8 = arith.constant 0 : index
    %4 = vector.load %arg1[%c0_7, %c0_8] : memref<16x32xf32, #tpu.memory_space<vmem>>, vector<16x32xf32>
    %5 = arith.truncf %4 : vector<16x32xf32> to vector<16x32xbf16>
    %cst = arith.constant dense<0.000000e+00> : vector<16x128xf32>
    %6 = tpu.matmul %5, %0, %cst {dimension_numbers = #tpu.dot_dimension_numbers<[1], [0], [0], [1], [0, 0, 1, 1], [], []>} : vector<16x32xbf16>, vector<32x128xbf16>, vector<16x128xf32> -> vector<16x128xf32>
    %7 = vector.broadcast %2 : vector<1x128xf32> to vector<16x128xf32>
    %8 = arith.addf %6, %7 : vector<16x128xf32>
    %cst_9 = arith.constant 0.000000e+00 : f32
    %9 = vector.broadcast %cst_9 : f32 to vector<16x128xf32>
    %10 = arith.maximumf %8, %9 : vector<16x128xf32>
    %11 = arith.truncf %10 : vector<16x128xf32> to vector<16x128xbf16>
    %cst_10 = arith.constant dense<0.000000e+00> : vector<16x4xf32>
    %12 = tpu.matmul %11, %1, %cst_10 {dimension_numbers = #tpu.dot_dimension_numbers<[1], [0], [0], [1], [0, 0, 1, 1], [], []>} : vector<16x128xbf16>, vector<128x4xbf16>, vector<16x4xf32> -> vector<16x4xf32>
    %13 = vector.broadcast %3 : vector<1x4xf32> to vector<16x4xf32>
    %14 = arith.addf %12, %13 : vector<16x4xf32>
    %15 = arith.mulf %14, %14 : vector<16x4xf32>
    %cst_11 = arith.constant dense<0.000000e+00> : vector<16xf32>
    %16 = vector.multi_reduction <add>, %15, %cst_11 [1] : vector<16x4xf32> to vector<16xf32>
    %17 = vector.shape_cast %16 : vector<16xf32> to vector<16x1xf32>
    %18 = math.rsqrt %17 : vector<16x1xf32>
    %19 = vector.broadcast %18 : vector<16x1xf32> to vector<16x4xf32>
    %20 = arith.mulf %14, %19 : vector<16x4xf32>
    %c0_12 = arith.constant 0 : index
    %c0_13 = arith.constant 0 : index
    %21 = vector.load %arg6[%c0_12, %c0_13] : memref<16x4xf32, #tpu.memory_space<vmem>>, vector<16x4xf32>
    tpu.vector_store %arg6[%c0_12, %c0_13], %20 {strides = array<i32>} : memref<16x4xf32, #tpu.memory_space<vmem>>, vector<16x4xf32>,
    return
  }
  func.func @transform_0(%arg0: i32) -> (i32, i32) {
    %c0_i32 = arith.constant 0 : i32
    %c0_i32_0 = arith.constant 0 : i32
    return %arg0, %c0_i32 : i32, i32
  }
  func.func @transform_1(%arg0: i32) -> (i32, i32) {
    %c0_i32 = arith.constant 0 : i32
    %c0_i32_0 = arith.constant 0 : i32
    %c0_i32_1 = arith.constant 0 : i32
    return %c0_i32, %c0_i32_0 : i32, i32
  }
  func.func @transform_2(%arg0: i32) -> (i32, i32) {
    %c0_i32 = arith.constant 0 : i32
    %c0_i32_0 = arith.constant 0 : i32
    %c0_i32_1 = arith.constant 0 : i32
    return %c0_i32, %c0_i32_0 : i32, i32
  }
  func.func @transform_3(%arg0: i32) -> (i32, i32) {
    %c0_i32 = arith.constant 0 : i32
    %c0_i32_0 = arith.constant 0 : i32
    %c0_i32_1 = arith.constant 0 : i32
    return %c0_i32, %c0_i32_0 : i32, i32
  }
  func.func @transform_4(%arg0: i32) -> (i32, i32) {
    %c0_i32 = arith.constant 0 : i32
    %c0_i32_0 = arith.constant 0 : i32
    %c0_i32_1 = arith.constant 0 : i32
    return %c0_i32, %c0_i32_0 : i32, i32
  }
  func.func @transform_5(%arg0: i32) -> (i32, i32) {
    %c0_i32 = arith.constant 0 : i32
    %c0_i32_0 = arith.constant 0 : i32
    return %arg0, %c0_i32 : i32, i32
  }
}

</mosaic_0001>

<llo_original>
// kernel: tpu_custom_call.1
$region0: #{tpu_custom_call.1}
  #allocation0 [shape = 'u32[]', space=smem, size = 0x4, offset = 0x4, fixed_abs, tag = 'smem constant byte address 0x4 - core index']
  #allocation1 [shape = 'u32[144,128]{1,0:T(1,128)}', space=vmem, size = 0x12000, scoped, tag = 'internal scratch']
  %s0 = inlined_call_operand.vmem [shape: f32[16,32], index: 0, kind: input, shape index: {}]
  %s1 = inlined_call_operand.vmem [shape: bf16[32,128], index: 1, kind: input, shape index: {}]
  %s2 = inlined_call_operand.vmem [shape: f32[1,128], index: 2, kind: input, shape index: {}]
  %s3 = inlined_call_operand.vmem [shape: bf16[128,4], index: 3, kind: input, shape index: {}]
  %s4 = inlined_call_operand.vmem [shape: f32[1,4], index: 4, kind: input, shape index: {}]
  %s5 = inlined_call_operand.vmem [shape: f32[16,4], index: 5, kind: output, shape index: {}]
  %s6 = sld [smem:[#allocation0]]
  $region30: #{tpu_custom_call.1} parent=0
    _
  %s8 = ssub.s32 1, %s6
  %s9 = scalar_select 0, %s8, %s6
  // Predicated region
  $region2: #{tpu_custom_call.1} parent=0 // pred_check
    _
  $region3: #{tpu_custom_call.1} parent=0 // pred_check_branch
    %11 = sbr.rel (0) target = $region5
  $region4: #{tpu_custom_call.1} parent=0 // pred_region
    _
  $region5: #{tpu_custom_call.1} parent=0 // pred_fallthru
    _
  // Predicated region
  $region6: #{tpu_custom_call.1} parent=0 // pred_check
    _
  $region7: #{tpu_custom_call.1} parent=0 // pred_check_branch
    %13 = sbr.rel (0) target = $region9
  $region8: #{tpu_custom_call.1} parent=0 // pred_region
    _
  $region9: #{tpu_custom_call.1} parent=0 // pred_fallthru
    _
  // Predicated region
  $region10: #{tpu_custom_call.1} parent=0 // pred_check
    _
  $region11: #{tpu_custom_call.1} parent=0 // pred_check_branch
    %15 = sbr.rel (0) target = $region13
  $region12: #{tpu_custom_call.1} parent=0 // pred_region
    _
  $region13: #{tpu_custom_call.1} parent=0 // pred_fallthru
    _
  // Predicated region
  $region14: #{tpu_custom_call.1} parent=0 // pred_check
    _
  $region15: #{tpu_custom_call.1} parent=0 // pred_check_branch
    %17 = sbr.rel (0) target = $region17
  $region16: #{tpu_custom_call.1} parent=0 // pred_region
    _
  $region17: #{tpu_custom_call.1} parent=0 // pred_fallthru
    _
  // Predicated region
  $region18: #{tpu_custom_call.1} parent=0 // pred_check
    _
  $region19: #{tpu_custom_call.1} parent=0 // pred_check_branch
    %19 = sbr.rel (0) target = $region21
  $region20: #{tpu_custom_call.1} parent=0 // pred_region
    _
  $region21: #{tpu_custom_call.1} parent=0 // pred_fallthru
    _
  %v21 = vld [vmem:[%s1] sm:$0xf]
  %v22 = vld [vmem:[%s1 + $0x4] sm:$0xf]
  %v23 = vld [vmem:[%s1 + $0x8] sm:$0xf]
  %v24 = vld [vmem:[%s1 + $0xc] sm:$0xf]
  %v25 = vld [vmem:[%s3] sm:$0xf]
  %v26 = vld [vmem:[%s3 + $0x4] sm:$0xf]
  %v27 = vld [vmem:[%s3 + $0x8] sm:$0xf]
  %v28 = vld [vmem:[%s3 + $0xc] sm:$0xf]
  %v29 = vld [vmem:[%s3 + $0x10] sm:$0xf]
  %v30 = vld [vmem:[%s3 + $0x14] sm:$0xf]
  %v31 = vld [vmem:[%s3 + $0x18] sm:$0xf]
  %v32 = vld [vmem:[%s3 + $0x1c] sm:$0xf]
  %v33 = vld [vmem:[%s3 + $0x20] sm:$0xf]
  %v34 = vld [vmem:[%s3 + $0x24] sm:$0xf]
  %v35 = vld [vmem:[%s3 + $0x28] sm:$0xf]
  %v36 = vld [vmem:[%s3 + $0x2c] sm:$0xf]
  %v37 = vld [vmem:[%s3 + $0x30] sm:$0xf]
  %v38 = vld [vmem:[%s3 + $0x34] sm:$0xf]
  %v39 = vld [vmem:[%s3 + $0x38] sm:$0xf]
  %v40 = vld [vmem:[%s3 + $0x3c] sm:$0xf]
  %v41 = vld [vmem:[%s2] sm:$0x1]
  %v42 = vld [vmem:[%s4] sm:$0x1]
  %v43 = vld [vmem:[%s0] sm:$0xff]
  %v44 = vld [vmem:[%s0 + $0x8] sm:$0xff]
  %v45 = vpack.c.bf16 %v44, %v43
  %v47 = vlaneseq
  %v48 = vshrl.u32 %v47, 7
  %v49 = vsub.s32 0, %v48
  %v50 = vrot.slane %v41, %v49
  %v56 = vunpack.c.l.b16 %v21
  %v57 = vunpack.c.l.b16 %v22
  %v58 = vunpack.c.l.b16 %v23
  %v59 = vunpack.c.l.b16 %v24
  %v60 = vpack.c.b16 %v57, %v56
  %v61 = vpack.c.b16 %v59, %v58
  %vm64 = vcmask 261120
  %v66 = vsel %vm64, %v45, 0
  %68 = vmatprep.subr.bf16.mxu0 0
  %69 = vmatpush1.bf16.msra.mxu0 0
  %70 = vmatprep.subr.bf16.mxu0 0
  %71 = vmatpush1.bf16.msra.mxu0 0
  %72 = vmatprep.subr.bf16.mxu0 0
  %73 = vmatpush1.bf16.msra.mxu0 0
  %74 = vmatprep.subr.bf16.mxu0 0
  %75 = vmatpush1.bf16.msra.mxu0 0
  %76 = vmatprep.subr.bf16.mxu0 0
  %77 = vmatpush1.bf16.msra.mxu0 0
  %78 = vmatprep.subr.bf16.mxu0 0
  %79 = vmatpush1.bf16.msra.mxu0 0
  %80 = vmatprep.subr.bf16.mxu0 0
  %81 = vmatpush1.bf16.msra.mxu0 %v61
  %82 = vmatprep.subr.bf16.mxu0 0
  %83 = vmatpush1.bf16.msra.mxu0 %v60
  %84 = vmatprep.subr.bf16.mxu0 0
  %85 = vmatpush2.bf16.msra.mxu0 0
  %86 = vmatprep.subr.bf16.mxu0 0
  %87 = vmatpush2.bf16.msra.mxu0 0
  %88 = vmatprep.subr.bf16.mxu0 0
  %89 = vmatpush2.bf16.msra.mxu0 0
  %90 = vmatprep.subr.bf16.mxu0 0
  %91 = vmatpush2.bf16.msra.mxu0 0
  %92 = vmatprep.subr.bf16.mxu0 0
  %93 = vmatpush2.bf16.msra.mxu0 0
  %94 = vmatprep.subr.bf16.mxu0 0
  %95 = vmatpush2.bf16.msra.mxu0 0
  %96 = vmatprep.subr.bf16.mxu0 0
  %97 = vmatpush2.bf16.msra.mxu0 0
  %98 = vmatprep.subr.bf16.mxu0 0
  %99 = vmatpush2.bf16.msra.mxu0 0
  %100 = vmatprep.mubr.bf16.mxu0 0
  %101 = vmatmul.mubr.bf16.gmra.mxu0 %v66
  %v102 = vpop.f32.mrf.mxu0
  %v103 = vadd.f32 %v50, %v102
  %v104 = vpop.f32.mrf.mxu0
  %v105 = vpop.f32.mrf.mxu0
  %v106 = vadd.f32 %v50, %v105
  %v107 = vpop.f32.mrf.mxu0
  %108 = vdwg.mxu0
  %v109 = vmax.f32 %v103, 0.0
  %v110 = vmax.f32 %v106, 0.0
  %v111 = vpack.c.bf16 %v110, %v109
  %v113 = vlaneseq
  %v114 = vshrl.u32 %v113, 7
  %v115 = vsub.s32 0, %v114
  %v116 = vrot.slane %v42, %v115
  %v134 = vunpack.c.l.b16 %v25
  %v135 = vunpack.c.l.b16 %v26
  %v136 = vunpack.c.l.b16 %v27
  %v137 = vunpack.c.l.b16 %v28
  %v138 = vunpack.c.l.b16 %v29
  %v139 = vunpack.c.l.b16 %v30
  %v140 = vunpack.c.l.b16 %v31
  %v141 = vunpack.c.l.b16 %v32
  %v142 = vunpack.c.l.b16 %v33
  %v143 = vunpack.c.l.b16 %v34
  %v144 = vunpack.c.l.b16 %v35
  %v145 = vunpack.c.l.b16 %v36
  %v146 = vunpack.c.l.b16 %v37
  %v147 = vunpack.c.l.b16 %v38
  %v148 = vunpack.c.l.b16 %v39
  %v149 = vunpack.c.l.b16 %v40
  %v150 = vpack.c.b16 %v135, %v134
  %v151 = vpack.c.b16 %v137, %v136
  %v152 = vpack.c.b16 %v139, %v138
  %v153 = vpack.c.b16 %v141, %v140
  %v154 = vpack.c.b16 %v143, %v142
  %v155 = vpack.c.b16 %v145, %v144
  %v156 = vpack.c.b16 %v147, %v146
  %v157 = vpack.c.b16 %v149, %v148
  %166 = vmatprep.subr.bf16.mxu0 0
  %167 = vmatpush1.bf16.msra.mxu0 %v157
  %168 = vmatprep.subr.bf16.mxu0 0
  %169 = vmatpush1.bf16.msra.mxu0 %v156
  %170 = vmatprep.subr.bf16.mxu0 0
  %171 = vmatpush1.bf16.msra.mxu0 %v155
  %172 = vmatprep.subr.bf16.mxu0 0
  %173 = vmatpush1.bf16.msra.mxu0 %v154
  %174 = vmatprep.subr.bf16.mxu0 0
  %175 = vmatpush1.bf16.msra.mxu0 %v153
  %176 = vmatprep.subr.bf16.mxu0 0
  %177 = vmatpush1.bf16.msra.mxu0 %v152
  %178 = vmatprep.subr.bf16.mxu0 0
  %179 = vmatpush1.bf16.msra.mxu0 %v151
  %180 = vmatprep.subr.bf16.mxu0 0
  %181 = vmatpush1.bf16.msra.mxu0 %v150
  %182 = vmatprep.subr.bf16.mxu0 0
  %183 = vmatpush2.bf16.msra.mxu0 0
  %184 = vmatprep.subr.bf16.mxu0 0
  %185 = vmatpush2.bf16.msra.mxu0 0
  %186 = vmatprep.subr.bf16.mxu0 0
  %187 = vmatpush2.bf16.msra.mxu0 0
  %188 = vmatprep.subr.bf16.mxu0 0
  %189 = vmatpush2.bf16.msra.mxu0 0
  %190 = vmatprep.subr.bf16.mxu0 0
  %191 = vmatpush2.bf16.msra.mxu0 0
  %192 = vmatprep.subr.bf16.mxu0 0
  %193 = vmatpush2.bf16.msra.mxu0 0
  %194 = vmatprep.subr.bf16.mxu0 0
  %195 = vmatpush2.bf16.msra.mxu0 0
  %196 = vmatprep.subr.bf16.mxu0 0
  %197 = vmatpush2.bf16.msra.mxu0 0
  %198 = vmatprep.mubr.bf16.mxu0 0
  %199 = vmatmul.mubr.bf16.gmra.mxu0 %v111
  %v200 = vpop.f32.mrf.mxu0
  %v201 = vadd.f32 %v116, %v200
  %v202 = vpop.f32.mrf.mxu0
  %v203 = vpop.f32.mrf.mxu0
  %v204 = vadd.f32 %v116, %v203
  %v205 = vpop.f32.mrf.mxu0
  %206 = vdwg.mxu0
  %v207 = vmul.f32 %v201, %v201
  %v208 = vmul.f32 %v204, %v204
  %vm209 = vcmask 31744
  %v210 = vsel %vm209, %v207, 0.0
  %211 = vadd.xlane.f32.xlu0 %v210
  %v212 = vpop.xlane.xlu0 %211
  %v213 = vsel %vm209, %v208, 0.0
  %214 = vadd.xlane.f32.xlu0 %v213
  %v215 = vpop.xlane.xlu0 %214
  %v216 = vrsqrt.pop %v212
  %v217 = vrsqrt.pop %v215
  %v218 = vmul.f32 %v201, %v216
  %v219 = vmul.f32 %v204, %v217
  %220 = vst.msk [vmem:[%s5] sm:$0xff] %vm209, %v218
  %221 = vst.msk [vmem:[%s5 + $0x8] sm:$0xff] %vm209, %v219
  // Predicated region
  $region22: #{tpu_custom_call.1} parent=0 // pred_check
    _
  $region23: #{tpu_custom_call.1} parent=0 // pred_check_branch
    %223 = sbr.rel (0) target = $region25
  $region24: #{tpu_custom_call.1} parent=0 // pred_region
    _
  $region25: #{tpu_custom_call.1} parent=0 // pred_fallthru
    _
  // Predicated region
  $region26: #{tpu_custom_call.1} parent=0 // pred_check
    _
  $region27: #{tpu_custom_call.1} parent=0 // pred_check_branch
    %225 = sbr.rel (0) target = $region29
  $region28: #{tpu_custom_call.1} parent=0 // pred_region
    _
  $region29: #{tpu_custom_call.1} parent=0 // pred_fallthru
    _

</llo_original>
